<compile_context>
chip_gen: v6e
topology: v6e:2x2x1
jax: 0.10.0
libtpu: 0.0.40
codegen_flags: <defaults>
</compile_context>

<pallas_src>
import functools

import jax
import jax.numpy as jnp
from jax.experimental import pallas as pl
from jax.experimental.pallas import tpu as pltpu


def _round_up(x: int, m: int) -> int:
    return ((x + m - 1) // m) * m


def _vmem_budget():
    """(tile_budget_bytes, vmem_limit_bytes) derived from the chip's VMEM."""
    try:
        cap = int(pltpu.get_tpu_info().vmem_capacity_bytes)
    except Exception:
        cap = 64 * 1024 * 1024  # v7x per-TC size: safe lower bound everywhere
    tile_budget = min(int(cap * 0.70), 96 * 1024 * 1024)   # ~45 MiB v7x, ~90 MiB v5e/v6e
    vmem_limit = min(int(cap * 0.80), 100 * 1024 * 1024)   # ~51 MiB v7x, 100 MiB v5e/v6e
    return tile_budget, max(vmem_limit, tile_budget)


_TILE_BUDGET, _VMEM_LIMIT = _vmem_budget()


def _linear_kernel(x_ref, w_ref, b_ref, o_ref):
    # x_ref: (tm, dim), w_ref: (dim, tn), b_ref: (1, tn), o_ref: (tm, tn).
    # bf16 MXU feeding with f32 accumulation; numerically ~equal to the
    # default-precision f32 MXU path, 4-8x faster.
    acc = jnp.dot(x_ref[...].astype(jnp.bfloat16),
                  w_ref[...].astype(jnp.bfloat16),
                  preferred_element_type=jnp.float32)
    o_ref[...] = (acc + b_ref[...].astype(jnp.float32)).astype(o_ref.dtype)


def _choose_tiles(m_rows: int, dim: int, out_dim: int, itemsize: int):
    """Pick (tm, tn) under the per-generation VMEM tile budget."""
    # Prefer tn == out_dim: single N tile -> whole weight stays VMEM resident
    # and x is streamed from HBM exactly once.  Fall back to 128-multiples;
    # the final partial N tile is masked by Pallas (far cheaper than padding
    # the weight and slicing the output afterwards).
    candidates = [out_dim] + [c for c in (512, 256, 128) if c < out_dim]
    min_rows = min(256, _round_up(m_rows, 8))
    tm, tn = 8, candidates[-1]
    for i, cand in enumerate(candidates):
        fixed = 2 * (dim * cand + cand) * itemsize      # weight + bias (double-buffered)
        per_row = 2 * (dim + cand) * itemsize           # x row + out row (double-buffered)
        rows = (_TILE_BUDGET - fixed) // max(per_row, 1)
        if rows >= min_rows or i == len(candidates) - 1:
            tm, tn = rows, cand
            break
    tm = int(min(max(tm, 8), 2048, _round_up(m_rows, 8)))
    tm = max((tm // 8) * 8, 8)                           # f32 sublane multiple
    return tm, tn


@functools.partial(jax.jit, static_argnames=("tm", "tn"))
def _pallas_linear(x2d, w, b2d, *, tm, tn):
    m_rows, dim = x2d.shape
    out_dim = w.shape[1]
    itemsize = x2d.dtype.itemsize

    # Grid ordered (N outer, M inner): weight/bias blocks depend only on the
    # N index, so they stay resident in VMEM across the inner M sweep.
    grid = (pl.cdiv(out_dim, tn), pl.cdiv(m_rows, tm))

    cost = pl.CostEstimate(
        flops=2 * m_rows * dim * out_dim,
        transcendentals=0,
        bytes_accessed=itemsize * (m_rows * dim + dim * out_dim + out_dim
                                   + m_rows * out_dim),
    )

    return pl.pallas_call(
        _linear_kernel,
        out_shape=jax.ShapeDtypeStruct((m_rows, out_dim), x2d.dtype),
        grid_spec=pltpu.PrefetchScalarGridSpec(
            num_scalar_prefetch=0,
            grid=grid,
            in_specs=[
                pl.BlockSpec((tm, dim), lambda n, m: (m, 0)),
                pl.BlockSpec((dim, tn), lambda n, m: (0, n)),
                pl.BlockSpec((1, tn), lambda n, m: (0, n)),
            ],
            out_specs=pl.BlockSpec((tm, tn), lambda n, m: (m, n)),
        ),
        compiler_params=pltpu.CompilerParams(
            # N "arbitrary", M "parallel": on v7x the 2-TC megacore split lands
            # on the many-tile M axis (balanced, no duplicated x reads); no
            # effect on single-core v5e/v6e.
            dimension_semantics=("arbitrary", "parallel"),
            vmem_limit_bytes=_VMEM_LIMIT,
        ),
        cost_estimate=cost,
    )(x2d, w, b2d)


def pallas_linear(x2d, w, b, *, tiles=None):
    """x2d: (M, dim); w: (dim, out_dim); b: (out_dim,) -> (M, out_dim)."""
    m_rows, dim = x2d.shape
    out_dim = w.shape[1]
    if tiles is None:
        tm, tn = _choose_tiles(m_rows, dim, out_dim, x2d.dtype.itemsize)
    else:
        tm, tn = tiles
    return _pallas_linear(x2d, w, b.reshape(1, out_dim), tm=tm, tn=tn)


# Below this many rows (or total elements) the Pallas launch overhead dwarfs
# the work; XLA's fused dot is faster for tiny conditioning tensors.
_PALLAS_MIN_ROWS = 128
_PALLAS_MIN_ELEMS = 16384


def linear_projection(x2d, w, b):
    m_rows = x2d.shape[0]
    if m_rows < _PALLAS_MIN_ROWS or x2d.size < _PALLAS_MIN_ELEMS:
        acc = jnp.dot(x2d, w, preferred_element_type=jnp.float32)
        return (acc + b.astype(jnp.float32)).astype(x2d.dtype)
    return pallas_linear(x2d, w, b)


class Conditioner:
    """JAX/Pallas port of the PyTorch Conditioner's parameterized path."""

    def __init__(self, dim: int, output_dim: int, project_out: bool = False,
                 key=None, dtype=jnp.float32):
        self.dim = dim
        self.output_dim = output_dim
        self.has_proj = (dim != output_dim) or project_out
        if self.has_proj:
            if key is None:
                key = jax.random.PRNGKey(0)
            kw, kb = jax.random.split(key)
            # Deterministic init mirroring nn.Linear: U(-1/sqrt(dim), 1/sqrt(dim)).
            bound = 1.0 / (dim ** 0.5)
            # PyTorch stores weight as (output_dim, dim); keep it transposed
            # (dim, output_dim) for the row-major matmul in the kernel.
            self.weight = jax.random.uniform(
                kw, (dim, output_dim), dtype=dtype, minval=-bound, maxval=bound)
            self.bias = jax.random.uniform(
                kb, (output_dim,), dtype=dtype, minval=-bound, maxval=bound)
        else:
            self.weight = None
            self.bias = None

    def proj_out(self, x):
        """Apply the projection (the Conditioner's compute). x: (..., dim)."""
        if not self.has_proj:
            return x  # nn.Identity
        lead = x.shape[:-1]
        x2d = x.reshape(-1, self.dim)
        y2d = linear_projection(x2d, self.weight, self.bias)
        return y2d.reshape(*lead, self.output_dim)


if __name__ == "__main__":
    key = jax.random.PRNGKey(0)
    k_x, k_p, k_big, k_tile = jax.random.split(key, 4)

    # --- Module-level test at small conditioning shapes (fast fallback). ---
    batch, seq, dim, output_dim = 2, 8, 32, 64
    x = jax.random.normal(k_x, (batch, seq, dim), dtype=jnp.float32)
    cond = Conditioner(dim=dim, output_dim=output_dim, project_out=False, key=k_p)
    y = jax.block_until_ready(cond.proj_out(x))
    y_ref = (x.reshape(-1, dim) @ cond.weight + cond.bias).reshape(
        batch, seq, output_dim)
    assert y.shape == (batch, seq, output_dim)
    assert jnp.allclose(y, y_ref, atol=1e-4, rtol=1e-4)

    # Identity path (dim == output_dim, project_out=False) must pass through.
    cond_id = Conditioner(dim=dim, output_dim=dim, project_out=False)
    y_id = jax.block_until_ready(cond_id.proj_out(x))
    assert jnp.array_equal(y_id, x)

    # --- Direct Pallas kernel at the same small shape (single tile each way). ---
    x_small = x.reshape(-1, dim)
    y_small = jax.block_until_ready(pallas_linear(x_small, cond.weight, cond.bias))
    y_small_ref = (jnp.dot(x_small, cond.weight,
                           precision=jax.lax.Precision.HIGHEST) + cond.bias)
    assert y_small.shape == (batch * seq, output_dim)
    assert jnp.allclose(y_small, y_small_ref, atol=1e-2, rtol=1e-2)

    # --- Larger Pallas test: non-128-multiple out_dim (576) written directly
    #     (no padding / no post-slice), weight fully VMEM-resident (single N
    #     tile), partial final M tile. ---
    m2, dim2, out2 = 1200, 384, 576
    kx2, kw2, kb2 = jax.random.split(k_big, 3)
    x2 = jax.random.normal(kx2, (m2, dim2), dtype=jnp.float32)
    bound2 = 1.0 / (dim2 ** 0.5)
    w2 = jax.random.uniform(kw2, (dim2, out2), dtype=jnp.float32,
                            minval=-bound2, maxval=bound2)
    b2 = jax.random.uniform(kb2, (out2,), dtype=jnp.float32,
                            minval=-bound2, maxval=bound2)
    y2 = jax.block_until_ready(pallas_linear(x2, w2, b2))
    y2_ref = jnp.dot(x2, w2, precision=jax.lax.Precision.HIGHEST) + b2
    assert y2.shape == (m2, out2)
    assert jnp.allclose(y2, y2_ref, atol=3e-2, rtol=3e-2)

    # --- Forced small tiles: exercises multi-tile N (masked final partial N
    #     tile, 576 cols with tn=256) and a partial M tile. ---
    m3 = 300
    x3 = jax.random.normal(k_tile, (m3, dim2), dtype=jnp.float32)
    y3 = jax.block_until_ready(pallas_linear(x3, w2, b2, tiles=(128, 256)))
    y3_ref = jnp.dot(x3, w2, precision=jax.lax.Precision.HIGHEST) + b2
    assert y3.shape == (m3, out2)
    assert jnp.allclose(y3, y3_ref, atol=3e-2, rtol=3e-2)

    print("KERNEL_OK")
</pallas_src>

<mosaic_0001>
module attributes {stable_mosaic.version = 11 : i64} {
  func.func @_linear_kernel(%arg0: i32, %arg1: i32, %arg2: memref<16x32xf32, #tpu.memory_space<vmem>>, %arg3: memref<32x64xf32, #tpu.memory_space<vmem>>, %arg4: memref<1x64xf32, #tpu.memory_space<vmem>>, %arg5: memref<16x64xf32, #tpu.memory_space<vmem>>) attributes {dimension_semantics = [#tpu.dimension_semantics<arbitrary>, #tpu.dimension_semantics<parallel>], iteration_bounds = array<i64: 1, 1>, scalar_prefetch = 0 : i64, scratch_operands = 0 : i64, tpu.core_type = #tpu.core_type<tc>, window_params = [{transform_indices = @transform_0, window_bounds = array<i64: 16, 32>}, {transform_indices = @transform_1, window_bounds = array<i64: 32, 64>}, {transform_indices = @transform_2, window_bounds = array<i64: 1, 64>}, {transform_indices = @transform_3, window_bounds = array<i64: 16, 64>}]} {
    %c0 = arith.constant 0 : index
    %c0_0 = arith.constant 0 : index
    %0 = vector.load %arg2[%c0, %c0_0] : memref<16x32xf32, #tpu.memory_space<vmem>>, vector<16x32xf32>
    %1 = arith.truncf %0 : vector<16x32xf32> to vector<16x32xbf16>
    %c0_1 = arith.constant 0 : index
    %c0_2 = arith.constant 0 : index
    %2 = vector.load %arg3[%c0_1, %c0_2] : memref<32x64xf32, #tpu.memory_space<vmem>>, vector<32x64xf32>
    %3 = arith.truncf %2 : vector<32x64xf32> to vector<32x64xbf16>
    %cst = arith.constant dense<0.000000e+00> : vector<16x64xf32>
    %4 = tpu.matmul %1, %3, %cst {dimension_numbers = #tpu.dot_dimension_numbers<[1], [0], [0], [1], [0, 0, 1, 1], [], []>} : vector<16x32xbf16>, vector<32x64xbf16>, vector<16x64xf32> -> vector<16x64xf32>
    %c0_3 = arith.constant 0 : index
    %c0_4 = arith.constant 0 : index
    %5 = vector.load %arg4[%c0_3, %c0_4] : memref<1x64xf32, #tpu.memory_space<vmem>>, vector<1x64xf32>
    %6 = vector.broadcast %5 : vector<1x64xf32> to vector<16x64xf32>
    %7 = arith.addf %4, %6 : vector<16x64xf32>
    %c0_5 = arith.constant 0 : index
    %c0_6 = arith.constant 0 : index
    %8 = vector.load %arg5[%c0_5, %c0_6] : memref<16x64xf32, #tpu.memory_space<vmem>>, vector<16x64xf32>
    tpu.vector_store %arg5[%c0_5, %c0_6], %7 {strides = array<i32>} : memref<16x64xf32, #tpu.memory_space<vmem>>, vector<16x64xf32>,
    return
  }
  func.func @transform_0(%arg0: i32, %arg1: i32) -> (i32, i32) {
    %c0_i32 = arith.constant 0 : i32
    %c0_i32_0 = arith.constant 0 : i32
    return %arg1, %c0_i32 : i32, i32
  }
  func.func @transform_1(%arg0: i32, %arg1: i32) -> (i32, i32) {
    %c0_i32 = arith.constant 0 : i32
    %c0_i32_0 = arith.constant 0 : i32
    return %c0_i32, %arg0 : i32, i32
  }
  func.func @transform_2(%arg0: i32, %arg1: i32) -> (i32, i32) {
    %c0_i32 = arith.constant 0 : i32
    %c0_i32_0 = arith.constant 0 : i32
    return %c0_i32, %arg0 : i32, i32
  }
  func.func @transform_3(%arg0: i32, %arg1: i32) -> (i32, i32) {
    %c0_i32 = arith.constant 0 : i32
    return %arg1, %arg0 : i32, i32
  }
}

</mosaic_0001>

<llo_original>
// kernel: _pallas_linear.1
$region0: #{_pallas_linear.1}
  #allocation0 [shape = 'u32[]', space=smem, size = 0x4, offset = 0x4, fixed_abs, tag = 'smem constant byte address 0x4 - core index']
  #allocation1 [shape = 'u32[144,128]{1,0:T(1,128)}', space=vmem, size = 0x12000, scoped, tag = 'internal scratch']
  %s0 = inlined_call_operand.hbm [shape: f32[16,32], index: 0, kind: input, shape index: {}]
  %s1 = inlined_call_operand.hbm [shape: f32[32,64], index: 1, kind: input, shape index: {}]
  %s2 = inlined_call_operand.vmem [shape: f32[1,64], index: 2, kind: input, shape index: {}]
  %s3 = inlined_call_operand.hbm [shape: f32[16,64], index: 3, kind: output, shape index: {}]
  %s4 = sld [smem:[#allocation0]]
  $region30: #{_pallas_linear.1} parent=0
    _
  %s6 = ssub.s32 1, %s4
  %s7 = scalar_select 0, %s6, %s4
  $region1: #{_pallas_linear.1} parent=0
    #allocation2 [shape = 'u8[8192]{0}', space=vmem, size = 0x2000, scoped, tag = 'input window, operand 0, single buffered']
    #allocation3 [shape = 's32[1]{0}', space=sflag, size = 0x4, scoped, tag = 'scoped memory for _pallas_linear.1']
    #allocation4 [shape = 's32[1]{0}', space=sflag, size = 0x4, scoped, tag = 'scoped memory for _pallas_linear.1']
    #allocation5 [shape = 'u8[16384]{0}', space=vmem, size = 0x4000, scoped, tag = 'input window, operand 1, single buffered']
    #allocation6 [shape = 's32[1]{0}', space=sflag, size = 0x4, scoped, tag = 'scoped memory for _pallas_linear.1']
    #allocation7 [shape = 'u8[8192]{0}', space=vmem, size = 0x2000, scoped, tag = 'output window, operand 0, single buffered']
    %8 = vsyncpa [#allocation3], 0
    %9 = vsyncpa [#allocation6], 0
    %10 = vsyncpa [#allocation4], 0
    // Predicated region
    $region2: #{_pallas_linear.1} parent=1 // pred_check
      _
    $region3: #{_pallas_linear.1} parent=1 // pred_check_branch
      %12 = sbr.rel (0) target = $region5
    $region4: #{_pallas_linear.1} parent=1 // pred_region
      %s14 = ssub.s32 256, 256
      %15 = vsyncadd [#allocation3], %s14
      %s16 = sshll.u32 [#allocation2], 4
      %s17 = int_to_ptr.vmem [resolvable:$true] %s16
      %22 = dma.hbm_to_vmem [thread:$0]  %s0, 256, %s17, [#allocation3], 128, 128, 8
    $region5: #{_pallas_linear.1} parent=1 // pred_fallthru
      _
    // Predicated region
    $region6: #{_pallas_linear.1} parent=1 // pred_check
      _
    $region7: #{_pallas_linear.1} parent=1 // pred_check_branch
      %24 = sbr.rel (0) target = $region9
    $region8: #{_pallas_linear.1} parent=1 // pred_region
      %s26 = ssub.s32 512, 512
      %27 = vsyncadd [#allocation6], %s26
      %s28 = sshll.u32 [#allocation5], 4
      %s29 = int_to_ptr.vmem [resolvable:$true] %s28
      %34 = dma.hbm_to_vmem [thread:$0]  %s1, 512, %s29, [#allocation6], 128, 128, 8
    $region9: #{_pallas_linear.1} parent=1 // pred_fallthru
      _
    // Predicated region
    $region10: #{_pallas_linear.1} parent=1 // pred_check
      _
    $region11: #{_pallas_linear.1} parent=1 // pred_check_branch
      %36 = sbr.rel (0) target = $region13
    $region12: #{_pallas_linear.1} parent=1 // pred_region
      _
    $region13: #{_pallas_linear.1} parent=1 // pred_fallthru
      _
    // Predicated region
    $region14: #{_pallas_linear.1} parent=1 // pred_check
      _
    $region15: #{_pallas_linear.1} parent=1 // pred_check_branch
      %38 = sbr.rel (0) target = $region17
    $region16: #{_pallas_linear.1} parent=1 // pred_region
      %39 = dma.done [#allocation3], 256
    $region17: #{_pallas_linear.1} parent=1 // pred_fallthru
      _
    // Predicated region
    $region18: #{_pallas_linear.1} parent=1 // pred_check
      _
    $region19: #{_pallas_linear.1} parent=1 // pred_check_branch
      %41 = sbr.rel (0) target = $region21
    $region20: #{_pallas_linear.1} parent=1 // pred_region
      %42 = dma.done [#allocation6], 512
    $region21: #{_pallas_linear.1} parent=1 // pred_fallthru
      _
    %v44 = vld [vmem:[#allocation2] sm:$0xff]
    %v45 = vld [vmem:[#allocation2 + $0x8] sm:$0xff]
    %v46 = vpack.c.bf16 %v45, %v44
    %v47 = vld [vmem:[#allocation5] sm:$0xff]
    %v48 = vld [vmem:[#allocation5 + $0x8] sm:$0xff]
    %v49 = vld [vmem:[#allocation5 + $0x10] sm:$0xff]
    %v50 = vld [vmem:[#allocation5 + $0x18] sm:$0xff]
    %v51 = vpack.c.bf16 %v48, %v47
    %v52 = vpack.c.bf16 %v50, %v49
    %v53 = vld [vmem:[%s2] sm:$0x1]
    %v55 = vlaneseq
    %v56 = vshrl.u32 %v55, 7
    %v57 = vsub.s32 0, %v56
    %v58 = vrot.slane %v53, %v57
    %vm60 = vcmask 261120
    %v62 = vsel %vm60, %v46, 0
    %64 = vmatprep.subr.bf16.mxu0 0
    %65 = vmatpush1.bf16.msra.mxu0 0
    %66 = vmatprep.subr.bf16.mxu0 0
    %67 = vmatpush1.bf16.msra.mxu0 0
    %68 = vmatprep.subr.bf16.mxu0 0
    %69 = vmatpush1.bf16.msra.mxu0 0
    %70 = vmatprep.subr.bf16.mxu0 0
    %71 = vmatpush1.bf16.msra.mxu0 0
    %72 = vmatprep.subr.bf16.mxu0 0
    %73 = vmatpush1.bf16.msra.mxu0 0
    %74 = vmatprep.subr.bf16.mxu0 0
    %75 = vmatpush1.bf16.msra.mxu0 0
    %76 = vmatprep.subr.bf16.mxu0 0
    %77 = vmatpush1.bf16.msra.mxu0 %v52
    %78 = vmatprep.subr.bf16.mxu0 0
    %79 = vmatpush1.bf16.msra.mxu0 %v51
    %80 = vmatprep.subr.bf16.mxu0 0
    %81 = vmatpush2.bf16.msra.mxu0 0
    %82 = vmatprep.subr.bf16.mxu0 0
    %83 = vmatpush2.bf16.msra.mxu0 0
    %84 = vmatprep.subr.bf16.mxu0 0
    %85 = vmatpush2.bf16.msra.mxu0 0
    %86 = vmatprep.subr.bf16.mxu0 0
    %87 = vmatpush2.bf16.msra.mxu0 0
    %88 = vmatprep.subr.bf16.mxu0 0
    %89 = vmatpush2.bf16.msra.mxu0 0
    %90 = vmatprep.subr.bf16.mxu0 0
    %91 = vmatpush2.bf16.msra.mxu0 0
    %92 = vmatprep.subr.bf16.mxu0 0
    %93 = vmatpush2.bf16.msra.mxu0 0
    %94 = vmatprep.subr.bf16.mxu0 0
    %95 = vmatpush2.bf16.msra.mxu0 0
    %96 = vmatprep.mubr.bf16.mxu0 0
    %97 = vmatmul.mubr.bf16.gmra.mxu0 %v62
    %v98 = vpop.f32.mrf.mxu0
    %v99 = vadd.f32 %v58, %v98
    %v100 = vpop.f32.mrf.mxu0
    %v101 = vpop.f32.mrf.mxu0
    %v102 = vadd.f32 %v58, %v101
    %v103 = vpop.f32.mrf.mxu0
    %104 = vdwg.mxu0
    %vm105 = vcmask 523264
    %106 = vst.msk [vmem:[#allocation7] sm:$0xff] %vm105, %v99
    %107 = vst.msk [vmem:[#allocation7 + $0x8] sm:$0xff] %vm105, %v102
    // Predicated region
    $region22: #{_pallas_linear.1} parent=1 // pred_check
      _
    $region23: #{_pallas_linear.1} parent=1 // pred_check_branch
      %109 = sbr.rel (0) target = $region25
    $region24: #{_pallas_linear.1} parent=1 // pred_region
      %s111 = ssub.s32 256, 256
      %112 = vsyncadd [#allocation4], %s111
      %s113 = sshll.u32 [#allocation7], 4
      %s114 = int_to_ptr.vmem [resolvable:$true] %s113
      %119 = dma.vmem_to_hbm [thread:$0]  %s114, 256, %s3, [#allocation4], 128, 128, 8
    $region25: #{_pallas_linear.1} parent=1 // pred_fallthru
      _
    // Predicated region
    $region26: #{_pallas_linear.1} parent=1 // pred_check
      _
    $region27: #{_pallas_linear.1} parent=1 // pred_check_branch
      %121 = sbr.rel (0) target = $region29
    $region28: #{_pallas_linear.1} parent=1 // pred_region
      %122 = dma.done [#allocation4], 256
    $region29: #{_pallas_linear.1} parent=1 // pred_fallthru
      _
    %123 = vsyncpa [#allocation3], 1
    %124 = vsyncpa [#allocation6], 1
    %125 = vsyncpa [#allocation4], 1

</llo_original>
